<compile_context>
chip_gen: v7x
topology: tpu7x:2x2x1
jax: 0.10.0
libtpu: 0.0.40
codegen_flags: <defaults>
</compile_context>

<pallas_src>
import functools

import jax
import jax.numpy as jnp
from jax.experimental import pallas as pl
from jax.experimental.pallas import tpu as pltpu


def _round_up(x, m):
    return (x + m - 1) // m * m


def _disalign_fused_kernel(x_ref, w_ref, aux_ref, out_ref, *, conf_col):
    """One (tm, tk) x (tk, OUT) MXU step + DisAlign epilogue on the last K step.

    x_ref   : (tm, tk)           compute dtype (f32 or bf16)
    w_ref   : (tk, OUT)          packed [cls | conf | bbox | pad] weights
    aux_ref : (8, OUT) f32       row 0 = packed bias, row 1 = scale-1 (fg lanes),
                                 row 2 = logit_bias (fg lanes), rest zero
    out_ref : (tm, OUT) f32      fused output tile, resident across the K axis
                                 (constant output block index) -> used as the
                                 f32 accumulator directly.
    """
    k = pl.program_id(1)

    @pl.when(k == 0)
    def _init():
        # Fold the bias add into the accumulator init.
        out_ref[...] = jnp.broadcast_to(aux_ref[0:1, :], out_ref.shape)

    out_ref[...] += jnp.dot(x_ref[...], w_ref[...],
                            preferred_element_type=jnp.float32)

    @pl.when(k == pl.num_programs(1) - 1)
    def _finalize():
        z = out_ref[...]                                      # (tm, OUT) f32
        # confidence column: one static lane read, sigmoid on EUP.
        conf = jax.nn.sigmoid(z[:, conf_col:conf_col + 1])    # (tm, 1)
        # DisAlign blend.  aux rows 1/2 are 0 on background/conf/bbox/pad lanes,
        # so those columns pass through untouched -> no slice/concat, no mask.
        out_ref[...] = z + conf * (z * aux_ref[1:2, :] + aux_ref[2:3, :])


@functools.partial(jax.jit,
                   static_argnames=("num_classes", "tm", "tk", "compute_dtype"))
def disalign_fast_rcnn_forward(x_nchw, params, *, num_classes,
                               tm=None, tk=None, compute_dtype=jnp.float32):
    """Flatten NCHW input and run the fused, tiled Pallas kernel."""
    n = x_nchw.shape[0]
    x = x_nchw.reshape(n, -1)                      # torch.flatten(x, start_dim=1)
    d = x.shape[1]

    wc, bc = params["cls_w"], params["cls_b"]
    wconf, bconf = params["conf_w"], params["conf_b"]
    wb, bb = params["bbox_w"], params["bbox_b"]
    lscale, lbias = params["logit_scale"], params["logit_bias"]

    num_bbox_out = wb.shape[1]
    conf_col = num_classes + 1                     # column index of conf logit
    out_raw = (num_classes + 1) + 1 + num_bbox_out
    out_dim = _round_up(out_raw, 128)              # lane-dense padded output

    # Tile sizes: multiples of 8 (f32) / 16 (bf16) sublanes, 128 lanes.  Keep
    # double-buffered x/w tiles well under the v7x ~32 MiB scoped VMEM budget.
    op_bytes = jnp.dtype(compute_dtype).itemsize
    sub = 16 if op_bytes < 4 else 8
    if tm is None:
        tm = min(256, _round_up(n, sub))
    if tk is None:
        tk = min(512, _round_up(d, 128))
    n_pad = _round_up(n, tm)
    d_pad = _round_up(d, tk)

    f32 = jnp.float32
    # --- pack the three projections into one lane-dense weight ---
    w_cat = jnp.concatenate([wc, wconf, wb], axis=1)                 # (d, out_raw)
    w_packed = jnp.pad(w_cat, ((0, d_pad - d), (0, out_dim - out_raw)))
    b_cat = jnp.concatenate([bc, bconf, bb], axis=1).reshape(-1)     # (out_raw,)

    # Single sublane-aligned aux tensor:
    #   row 0: packed bias (0 in padding lanes)
    #   row 1: logit_scale - 1 on fg lanes, 0 elsewhere
    #   row 2: logit_bias on fg lanes, 0 elsewhere
    aux = jnp.zeros((8, out_dim), f32)
    aux = aux.at[0, :out_raw].set(b_cat.astype(f32))
    aux = aux.at[1, :num_classes].set(lscale.reshape(-1).astype(f32) - 1.0)
    aux = aux.at[2, :num_classes].set(lbias.reshape(-1).astype(f32))

    x_pad = jnp.pad(x, ((0, n_pad - n), (0, d_pad - d)))

    # bf16 operands (recommended on v6e/v7x); accumulation & epilogue stay f32.
    x_c = x_pad.astype(compute_dtype)
    w_c = w_packed.astype(compute_dtype)

    grid = (n_pad // tm, d_pad // tk)
    kernel = functools.partial(_disalign_fused_kernel, conf_col=conf_col)

    cost = pl.CostEstimate(
        flops=2 * n_pad * d_pad * out_dim,
        transcendentals=n_pad,  # one sigmoid per proposal row
        bytes_accessed=(n_pad * d_pad + d_pad * out_dim) * op_bytes
        + 8 * out_dim * 4 + n_pad * out_dim * 4,
    )

    fused = pl.pallas_call(
        kernel,
        out_shape=jax.ShapeDtypeStruct((n_pad, out_dim), jnp.float32),
        grid_spec=pltpu.PrefetchScalarGridSpec(
            num_scalar_prefetch=0,
            grid=grid,
            in_specs=[
                pl.BlockSpec((tm, tk), lambda i, k: (i, k)),         # x tile
                pl.BlockSpec((tk, out_dim), lambda i, k: (k, 0)),    # packed W
                pl.BlockSpec((8, out_dim), lambda i, k: (0, 0)),     # aux (bias/scale/lbias)
            ],
            out_specs=pl.BlockSpec((tm, out_dim), lambda i, k: (i, 0)),
        ),
        compiler_params=pltpu.CompilerParams(
            dimension_semantics=("parallel", "arbitrary"),
            vmem_limit_bytes=32 * 1024 * 1024,
        ),
        cost_estimate=cost,
    )(x_c, w_c, aux)

    # Column split of the lane-dense fused result (cheap XLA slices).
    aligned_scores = fused[:n, :num_classes + 1]
    proposal_deltas = fused[:n, conf_col + 1:conf_col + 1 + num_bbox_out]
    return aligned_scores, proposal_deltas


def init_params(key, input_size, num_classes, cls_agnostic_bbox_reg, box_dim=4):
    """Deterministic init mirroring the PyTorch module's __init__ (weights transposed)."""
    num_bbox_reg_classes = 1 if cls_agnostic_bbox_reg else num_classes
    k_cls, k_conf, k_bbox = jax.random.split(key, 3)
    cls_w = 0.01 * jax.random.normal(k_cls, (input_size, num_classes + 1), jnp.float32)
    conf_w = 0.01 * jax.random.normal(k_conf, (input_size, 1), jnp.float32)
    bbox_w = 0.001 * jax.random.normal(
        k_bbox, (input_size, num_bbox_reg_classes * box_dim), jnp.float32)
    return {
        "cls_w": cls_w,
        "cls_b": jnp.zeros((1, num_classes + 1), jnp.float32),
        "conf_w": conf_w,
        "conf_b": jnp.zeros((1, 1), jnp.float32),
        "bbox_w": bbox_w,
        "bbox_b": jnp.zeros((1, num_bbox_reg_classes * box_dim), jnp.float32),
        "logit_scale": jnp.ones((1, num_classes), jnp.float32),
        "logit_bias": jnp.zeros((1, num_classes), jnp.float32),
    }


def _reference_forward(x_nchw, params, num_classes):
    """Pure-JAX reference mirroring the PyTorch forward exactly."""
    x = x_nchw.reshape(x_nchw.shape[0], -1)
    scores = x @ params["cls_w"] + params["cls_b"]
    confidence = jax.nn.sigmoid(x @ params["conf_w"] + params["conf_b"])
    fg = scores[:, :-1]
    scores_tmp = confidence * (fg * params["logit_scale"] + params["logit_bias"])
    scores_tmp = scores_tmp + (1.0 - confidence) * fg
    aligned = jnp.concatenate([scores_tmp, scores[:, -1:]], axis=1)
    deltas = x @ params["bbox_w"] + params["bbox_b"]
    return aligned, deltas


if __name__ == "__main__":
    key = jax.random.PRNGKey(0)
    k_x, k_p = jax.random.split(key)

    # Small shapes consistent with the module: N proposals, per-proposal pooled
    # feature (C, H, W) -> input_size = C*H*W = 256, num_classes = 8.
    N, C, H, W = 16, 4, 8, 8
    num_classes = 8
    box_dim = 4
    cls_agnostic_bbox_reg = False

    x = jax.random.normal(k_x, (N, C, H, W), jnp.float32)
    params = init_params(k_p, C * H * W, num_classes, cls_agnostic_bbox_reg, box_dim)
    ref_scores, ref_deltas = _reference_forward(x, params, num_classes)

    # f32 operand path with a 2-step K reduction (tk=128) -> exercises the
    # resident-output accumulator init/finalize; tight tolerance.
    scores, deltas = disalign_fast_rcnn_forward(
        x, params, num_classes=num_classes, tk=128)
    jax.block_until_ready((scores, deltas))
    assert scores.shape == (N, num_classes + 1)
    assert deltas.shape == (N, num_classes * box_dim)
    assert jnp.allclose(scores, ref_scores, atol=1e-5, rtol=1e-5)
    assert jnp.allclose(deltas, ref_deltas, atol=1e-5, rtol=1e-5)

    # bf16 operand path (v6e/v7x recommendation): f32 accumulate + f32 epilogue,
    # only operand-rounding error remains -> loose tolerance.
    scores_bf, deltas_bf = disalign_fast_rcnn_forward(
        x, params, num_classes=num_classes, tk=128, compute_dtype=jnp.bfloat16)
    jax.block_until_ready((scores_bf, deltas_bf))
    assert jnp.allclose(scores_bf, ref_scores, atol=3e-2, rtol=3e-2)
    assert jnp.allclose(deltas_bf, ref_deltas, atol=3e-2, rtol=3e-2)

    print("KERNEL_OK")
</pallas_src>

<mosaic_0001>
module attributes {stable_mosaic.version = 11 : i64} {
  func.func @_disalign_fused_kernel(%arg0: i32, %arg1: i32, %arg2: memref<16x128xf32, #tpu.memory_space<vmem>>, %arg3: memref<128x128xf32, #tpu.memory_space<vmem>>, %arg4: memref<8x128xf32, #tpu.memory_space<vmem>>, %arg5: memref<16x128xf32, #tpu.memory_space<vmem>>) attributes {dimension_semantics = [#tpu.dimension_semantics<parallel>, #tpu.dimension_semantics<arbitrary>], iteration_bounds = array<i64: 1, 2>, scalar_prefetch = 0 : i64, scratch_operands = 0 : i64, tpu.core_type = #tpu.core_type<tc>, window_params = [{transform_indices = @transform_0, window_bounds = array<i64: 16, 128>}, {transform_indices = @transform_1, window_bounds = array<i64: 128, 128>}, {pipeline_mode = #tpu.pipeline_mode<synchronous>, transform_indices = @transform_2, window_bounds = array<i64: 8, 128>}, {transform_indices = @transform_3, window_bounds = array<i64: 16, 128>}]} {
    %c0_i32 = arith.constant 0 : i32
    %0 = arith.cmpi eq, %arg1, %c0_i32 : i32
    %1 = arith.extui %0 : i1 to i32
    %c0_i32_0 = arith.constant 0 : i32
    %2 = arith.cmpi ne, %1, %c0_i32_0 : i32
    scf.if %2 {
      %c0_9 = arith.constant 0 : index
      %c0_10 = arith.constant 0 : index
      %12 = vector.load %arg4[%c0_9, %c0_10] : memref<8x128xf32, #tpu.memory_space<vmem>>, vector<1x128xf32>
      %13 = vector.shape_cast %12 : vector<1x128xf32> to vector<1x128xf32>
      %14 = vector.broadcast %13 : vector<1x128xf32> to vector<16x128xf32>
      %c0_11 = arith.constant 0 : index
      %c0_12 = arith.constant 0 : index
      %15 = vector.load %arg5[%c0_11, %c0_12] : memref<16x128xf32, #tpu.memory_space<vmem>>, vector<16x128xf32>
      tpu.vector_store %arg5[%c0_11, %c0_12], %14 {strides = array<i32>} : memref<16x128xf32, #tpu.memory_space<vmem>>, vector<16x128xf32>,
    } else {
    }
    %c0 = arith.constant 0 : index
    %c0_1 = arith.constant 0 : index
    %3 = vector.load %arg5[%c0, %c0_1] : memref<16x128xf32, #tpu.memory_space<vmem>>, vector<16x128xf32>
    %c0_2 = arith.constant 0 : index
    %c0_3 = arith.constant 0 : index
    %4 = vector.load %arg2[%c0_2, %c0_3] : memref<16x128xf32, #tpu.memory_space<vmem>>, vector<16x128xf32>
    %c0_4 = arith.constant 0 : index
    %c0_5 = arith.constant 0 : index
    %5 = vector.load %arg3[%c0_4, %c0_5] : memref<128x128xf32, #tpu.memory_space<vmem>>, vector<128x128xf32>
    %cst = arith.constant dense<0.000000e+00> : vector<16x128xf32>
    %6 = tpu.matmul %4, %5, %cst {dimension_numbers = #tpu.dot_dimension_numbers<[1], [0], [0], [1], [0, 0, 1, 1], [], []>} : vector<16x128xf32>, vector<128x128xf32>, vector<16x128xf32> -> vector<16x128xf32>
    %7 = arith.addf %3, %6 : vector<16x128xf32>
    %c0_6 = arith.constant 0 : index
    %c0_7 = arith.constant 0 : index
    %8 = vector.load %arg5[%c0_6, %c0_7] : memref<16x128xf32, #tpu.memory_space<vmem>>, vector<16x128xf32>
    tpu.vector_store %arg5[%c0_6, %c0_7], %7 {strides = array<i32>} : memref<16x128xf32, #tpu.memory_space<vmem>>, vector<16x128xf32>,
    %c1_i32 = arith.constant 1 : i32
    %9 = arith.cmpi eq, %arg1, %c1_i32 : i32
    %10 = arith.extui %9 : i1 to i32
    %c0_i32_8 = arith.constant 0 : i32
    %11 = arith.cmpi ne, %10, %c0_i32_8 : i32
    scf.if %11 {
      %c0_9 = arith.constant 0 : index
      %c0_10 = arith.constant 0 : index
      %12 = vector.load %arg5[%c0_9, %c0_10] : memref<16x128xf32, #tpu.memory_space<vmem>>, vector<16x128xf32>
      %13 = vector.extract_strided_slice %12 {offsets = [0, 9], sizes = [16, 1], strides = [1, 1]} : vector<16x128xf32> to vector<16x1xf32>
      %14 = arith.negf %13 : vector<16x1xf32>
      %15 = math.exp %14 : vector<16x1xf32>
      %cst_11 = arith.constant 1.000000e+00 : f32
      %16 = vector.broadcast %cst_11 : f32 to vector<16x1xf32>
      %17 = arith.addf %16, %15 : vector<16x1xf32>
      %18 = arith.divf %16, %17 : vector<16x1xf32>
      %c1 = arith.constant 1 : index
      %c0_12 = arith.constant 0 : index
      %19 = vector.load %arg4[%c1, %c0_12] : memref<8x128xf32, #tpu.memory_space<vmem>>, vector<1x128xf32>
      %20 = vector.broadcast %19 : vector<1x128xf32> to vector<16x128xf32>
      %21 = arith.mulf %12, %20 : vector<16x128xf32>
      %c2 = arith.constant 2 : index
      %c0_13 = arith.constant 0 : index
      %22 = vector.load %arg4[%c2, %c0_13] : memref<8x128xf32, #tpu.memory_space<vmem>>, vector<1x128xf32>
      %23 = vector.broadcast %22 : vector<1x128xf32> to vector<16x128xf32>
      %24 = arith.addf %21, %23 : vector<16x128xf32>
      %25 = vector.broadcast %18 : vector<16x1xf32> to vector<16x128xf32>
      %26 = arith.mulf %25, %24 : vector<16x128xf32>
      %27 = arith.addf %12, %26 : vector<16x128xf32>
      %c0_14 = arith.constant 0 : index
      %c0_15 = arith.constant 0 : index
      %28 = vector.load %arg5[%c0_14, %c0_15] : memref<16x128xf32, #tpu.memory_space<vmem>>, vector<16x128xf32>
      tpu.vector_store %arg5[%c0_14, %c0_15], %27 {strides = array<i32>} : memref<16x128xf32, #tpu.memory_space<vmem>>, vector<16x128xf32>,
    } else {
    }
    return
  }
  func.func @transform_0(%arg0: i32, %arg1: i32) -> (i32, i32) {
    %c0_i32 = arith.constant 0 : i32
    return %arg0, %arg1 : i32, i32
  }
  func.func @transform_1(%arg0: i32, %arg1: i32) -> (i32, i32) {
    %c0_i32 = arith.constant 0 : i32
    %c0_i32_0 = arith.constant 0 : i32
    return %arg1, %c0_i32 : i32, i32
  }
  func.func @transform_2(%arg0: i32, %arg1: i32) -> (i32, i32) {
    %c0_i32 = arith.constant 0 : i32
    %c0_i32_0 = arith.constant 0 : i32
    %c0_i32_1 = arith.constant 0 : i32
    return %c0_i32, %c0_i32_0 : i32, i32
  }
  func.func @transform_3(%arg0: i32, %arg1: i32) -> (i32, i32) {
    %c0_i32 = arith.constant 0 : i32
    %c0_i32_0 = arith.constant 0 : i32
    return %arg0, %c0_i32 : i32, i32
  }
}

</mosaic_0001>

<llo_original>
// kernel: disalign_fast_rcnn_forward.1
$region0: #{disalign_fast_rcnn_forward.1}
  #allocation0 [shape = 'u32[]', space=smem, size = 0x4, offset = 0x4, fixed_abs, tag = 'smem constant byte address 0x4 - core index']
  #allocation1 [shape = 'u32[144,128]{1,0:T(1,128)}', space=vmem, size = 0x12000, scoped, tag = 'internal scratch']
  %s0 = inlined_call_operand.vmem [shape: f32[16,256], index: 0, kind: input, shape index: {}]
  %s1 = inlined_call_operand.vmem [shape: f32[256,128], index: 1, kind: input, shape index: {}]
  %s2 = inlined_call_operand.vmem [shape: f32[8,128], index: 2, kind: input, shape index: {}]
  %s3 = inlined_call_operand.vmem [shape: f32[16,128], index: 3, kind: output, shape index: {}]
  %s4 = sld [smem:[#allocation0]]
  $region91: #{disalign_fast_rcnn_forward.1} parent=0
    _
  %s6 = ssub.s32 1, %s4
  %s7 = scalar_select 0, %s6, %s4
  $region1: #{disalign_fast_rcnn_forward.1} parent=0
    #allocation2 [shape = 'u8[16384]{0}', space=vmem, size = 0x4000, scoped, tag = 'input window, operand 0']
    loop: start=0, step=1, limit=4
    $region2: #{disalign_fast_rcnn_forward.1} parent=1 // loop_pre_header
      _
    $region3: #{disalign_fast_rcnn_forward.1} parent=1 // loop_header
      %s9 = sphi 0, %s13
      %p10 = scmp.ge.s32.totalorder %s9, 4
      %s16 = sphi 0, %s28
      %s17 = sphi 0, %s24
      %s18 = sphi 0, %s16
      %s19 = sphi 0, %s17
      %s20 = sphi 0, %s18
      %s21 = sphi 0, %s19
      %s33 = sphi 0, %s35
      %s36 = sphi 0, %s33
      %s37 = sphi 0, %s36
      %s53 = sphi 0, %s37
      %s59 = sphi 0, %s61
      %s62 = sphi 0, %s59
      %s63 = sphi 0, %s62
      %s79 = sphi 0, %s63
      %s83 = sphi 0, %s83
      %s85 = sphi 0, %s83
      %s86 = sphi 0, %s85
      %s100 = sphi 0, %s86
      %s106 = sphi 0, %s108
      %s109 = sphi 0, %s106
      %s110 = sphi 0, %s109
      %s126 = sphi 0, %s110
    $region4: #{disalign_fast_rcnn_forward.1} parent=1 // loop_header_branch
      %12 = sbr.rel (%p10) target = $region8
    $region5: #{disalign_fast_rcnn_forward.1} parent=1 // loop_body
      %s14 = ssub.s32 %s9, 1
      %s15 = ssub.s32 %s9, 2
      %s22 = sadd.s32 1, %s17
      %p23 = scmp.ge.s32.totalorder %s22, 2
      %s24 = scalar_select %p23, 0, %s22
      %s25 = sadd.s32 1, %s16
      %s26 = scalar_select %p23, %s25, %s16
      %p27 = scmp.ge.s32.totalorder %s26, 1
      %s28 = scalar_select %p27, 0, %s26
      %s29 = ssub.s32 %s16, %s28
      %s30 = ssub.s32 %s17, %s24
      %s31 = sor.u32 %s29, %s30
      %p32 = scmp.eq.s32.totalorder %s31, 0
      %s34 = sadd.s32 %s33, 1
      %s35 = scalar_select %p32, %s33, %s34
      %p38 = pneg %p32
      %p39 = scmp.eq.s32.totalorder %s9, 1
      %p40 = por %p38, %p39
      %p41 = scmp.ne.s32.totalorder %s33, %s36
      %p42 = scmp.eq.s32.totalorder %s9, 0
      %p43 = por %p41, %p42
      %p44 = scmp.ne.s32.totalorder %s33, %s36
      %p45 = scmp.eq.s32.totalorder %s14, 1
      %p46 = por %p44, %p45
      %p47 = scmp.ne.s32.totalorder %s36, %s37
      %p48 = scmp.eq.s32.totalorder %s14, 0
      %p49 = por %p47, %p48
      %p50 = scmp.ne.s32.totalorder %s36, %s37
      %p51 = scmp.eq.s32.totalorder %s15, 1
      %p52 = por %p50, %p51
      %p54 = scmp.ne.s32.totalorder %s37, %s53
      %p55 = scmp.eq.s32.totalorder %s15, 0
      %p56 = por %p54, %p55
      %s57 = ssub.s32 %s17, %s24
      %p58 = scmp.eq.s32.totalorder %s57, 0
      %s60 = sadd.s32 %s59, 1
      %s61 = scalar_select %p58, %s59, %s60
      %p64 = pneg %p58
      %p65 = scmp.eq.s32.totalorder %s9, 1
      %p66 = por %p64, %p65
      %p67 = scmp.ne.s32.totalorder %s59, %s62
      %p68 = scmp.eq.s32.totalorder %s9, 0
      %p69 = por %p67, %p68
      %p70 = scmp.ne.s32.totalorder %s59, %s62
      %p71 = scmp.eq.s32.totalorder %s14, 1
      %p72 = por %p70, %p71
      %p73 = scmp.ne.s32.totalorder %s62, %s63
      %p74 = scmp.eq.s32.totalorder %s14, 0
      %p75 = por %p73, %p74
      %p76 = scmp.ne.s32.totalorder %s62, %s63
      %p77 = scmp.eq.s32.totalorder %s15, 1
      %p78 = por %p76, %p77
      %p80 = scmp.ne.s32.totalorder %s63, %s79
      %p81 = scmp.eq.s32.totalorder %s15, 0
      %p82 = por %p80, %p81
      %s84 = sadd.s32 %s83, 1
      %p87 = scmp.eq.s32.totalorder %s9, 1
      %p88 = scmp.ne.s32.totalorder %s83, %s85
      %p89 = scmp.eq.s32.totalorder %s9, 0
      %p90 = por %p88, %p89
      %p91 = scmp.ne.s32.totalorder %s83, %s85
      %p92 = scmp.eq.s32.totalorder %s14, 1
      %p93 = por %p91, %p92
      %p94 = scmp.ne.s32.totalorder %s85, %s86
      %p95 = scmp.eq.s32.totalorder %s14, 0
      %p96 = por %p94, %p95
      %p97 = scmp.ne.s32.totalorder %s85, %s86
      %p98 = scmp.eq.s32.totalorder %s15, 1
      %p99 = por %p97, %p98
      %p101 = scmp.ne.s32.totalorder %s86, %s100
      %p102 = scmp.eq.s32.totalorder %s15, 0
      %p103 = por %p101, %p102
      %s104 = ssub.s32 %s16, %s28
      %p105 = scmp.eq.s32.totalorder %s104, 0
      %s107 = sadd.s32 %s106, 1
      %s108 = scalar_select %p105, %s106, %s107
      %p111 = pneg %p105
      %p112 = scmp.eq.s32.totalorder %s9, 1
      %p113 = por %p111, %p112
      %p114 = scmp.ne.s32.totalorder %s106, %s109
      %p115 = scmp.eq.s32.totalorder %s9, 0
      %p116 = por %p114, %p115
      %p117 = scmp.ne.s32.totalorder %s106, %s109
      %p118 = scmp.eq.s32.totalorder %s14, 1
      %p119 = por %p117, %p118
      %p120 = scmp.ne.s32.totalorder %s109, %s110
      %p121 = scmp.eq.s32.totalorder %s14, 0
      %p122 = por %p120, %p121
      %p123 = scmp.ne.s32.totalorder %s109, %s110
      %p124 = scmp.eq.s32.totalorder %s15, 1
      %p125 = por %p123, %p124
      %p127 = scmp.ne.s32.totalorder %s110, %s126
      %p128 = scmp.eq.s32.totalorder %s15, 0
      %p129 = por %p127, %p128
      %p130 = scmp.le.s32.totalorder 1, %s9
      %p131 = scmp.lt.s32.totalorder %s9, 3
      %p132 = pnand %p130, %p131
      %p133 = pneg %p132
      // Predicated region
      $region9: #{disalign_fast_rcnn_forward.1} parent=5 // pred_check
        _
      $region10: #{disalign_fast_rcnn_forward.1} parent=5 // pred_check_branch
        %135 = sbr.rel (%p132) target = $region12
      $region11: #{disalign_fast_rcnn_forward.1} parent=5 // pred_region
        %s136 = ssub.s32 %s9, 1
        // Predicated region
        $region13: #{disalign_fast_rcnn_forward.1} parent=11 // pred_check
          %p137 = pneg %p96
        $region14: #{disalign_fast_rcnn_forward.1} parent=11 // pred_check_branch
          %139 = sbr.rel (%p137) target = $region16
        $region15: #{disalign_fast_rcnn_forward.1} parent=11 // pred_region
          _
        $region16: #{disalign_fast_rcnn_forward.1} parent=11 // pred_fallthru
          _
      $region12: #{disalign_fast_rcnn_forward.1} parent=5 // pred_fallthru
        _
      %p140 = scmp.lt.s32.totalorder %s9, 2
      // Predicated region
      $region17: #{disalign_fast_rcnn_forward.1} parent=5 // pred_check
        %p141 = pneg %p140
      $region18: #{disalign_fast_rcnn_forward.1} parent=5 // pred_check_branch
        %143 = sbr.rel (%p141) target = $region20
      $region19: #{disalign_fast_rcnn_forward.1} parent=5 // pred_region
        // Predicated region
        $region21: #{disalign_fast_rcnn_forward.1} parent=19 // pred_check
          %p144 = pneg %p43
        $region22: #{disalign_fast_rcnn_forward.1} parent=19 // pred_check_branch
          %146 = sbr.rel (%p144) target = $region24
        $region23: #{disalign_fast_rcnn_forward.1} parent=19 // pred_region
          %s147 = sand.u32 %s33, 1
          %s148 = sand.u32 %s33, 1
          %s149 = smul.addr %s148, 16
          %s150 = scalar_lea.vmem [#allocation2], %s149
          %s151 = smul.u32 2, %s16
          %s152 = smul.addr %s151, 2
          %s153 = sadd.s32 %s17, %s152
          %s154 = smul.addr %s153, 8
          %s155 = scalar_lea.vmem %s0, %s154
          // Predicated region
          $region25: #{disalign_fast_rcnn_forward.1} parent=23 // pred_check
            _
          $region26: #{disalign_fast_rcnn_forward.1} parent=23 // pred_check_branch
            %157 = sbr.rel (0) target = $region28
          $region27: #{disalign_fast_rcnn_forward.1} parent=23 // pred_region
            // Predicated region
            $region29: #{disalign_fast_rcnn_forward.1} parent=27 // pred_check
              _
            $region30: #{disalign_fast_rcnn_forward.1} parent=27 // pred_check_branch
              %159 = sbr.rel (0) target = $region32
            $region31: #{disalign_fast_rcnn_forward.1} parent=27 // pred_region
              // Predicated region
              $region44: #{disalign_fast_rcnn_forward.1} parent=31 // pred_check
                _
              $region45: #{disalign_fast_rcnn_forward.1} parent=31 // pred_check_branch
                %176 = sbr.rel (0) target = $region47
              $region46: #{disalign_fast_rcnn_forward.1} parent=31 // pred_region
                loop: start=0, step=1, limit=1
                $region48: #{disalign_fast_rcnn_forward.1} parent=46 // loop_pre_header
                  _
                $region49: #{disalign_fast_rcnn_forward.1} parent=46 // loop_header
                  %s178 = sphi 0, %s182
                  %p179 = scmp.ge.s32.totalorder %s178, 1
                  %s183 = sphi %s155, %s155
                  %s184 = sphi %s150, %s150
                $region50: #{disalign_fast_rcnn_forward.1} parent=46 // loop_header_branch
                  %181 = sbr.rel (%p179) target = $region54
                $region51: #{disalign_fast_rcnn_forward.1} parent=46 // loop_body
                  %v185 = vld [vmem:[%s183] sm:$0xff]
                  %186 = vst [vmem:[%s184] sm:$0xff] %v185
                  %v187 = vld [vmem:[%s183 + $0x10] sm:$0xff]
                  %188 = vst [vmem:[%s184 + $0x8] sm:$0xff] %v187
                $region52: #{disalign_fast_rcnn_forward.1} parent=46 // loop_footer
                  %s182 = sadd.s32 1, %s178
                $region53: #{disalign_fast_rcnn_forward.1} parent=46 // loop_footer_branch
                  %177 = sbr.rel target = $region49
                $region54: #{disalign_fast_rcnn_forward.1} parent=46 // loop_exit
                  _
              $region47: #{disalign_fast_rcnn_forward.1} parent=31 // pred_fallthru
                _
              // Predicated region
              $region55: #{disalign_fast_rcnn_forward.1} parent=31 // pred_check
                _
              $region56: #{disalign_fast_rcnn_forward.1} parent=31 // pred_check_branch
                %190 = sbr.rel target = $region58
              $region57: #{disalign_fast_rcnn_forward.1} parent=31 // pred_region
                _
              $region58: #{disalign_fast_rcnn_forward.1} parent=31 // pred_fallthru
                _
            $region32: #{disalign_fast_rcnn_forward.1} parent=27 // pred_fallthru
              _
            // Predicated region
            $region33: #{disalign_fast_rcnn_forward.1} parent=27 // pred_check
              _
            $region34: #{disalign_fast_rcnn_forward.1} parent=27 // pred_check_branch
              %161 = sbr.rel target = $region36
            $region35: #{disalign_fast_rcnn_forward.1} parent=27 // pred_region
              loop: start=0, step=1, limit=1
              $region37: #{disalign_fast_rcnn_forward.1} parent=35 // loop_pre_header
                _
              $region38: #{disalign_fast_rcnn_forward.1} parent=35 // loop_header
                %s164 = sphi 0, %s168
                %p165 = scmp.ge.s32.totalorder %s164, 1
                %s169 = sphi %s155, %s155
                %s170 = sphi %s150, %s150
              $region39: #{disalign_fast_rcnn_forward.1} parent=35 // loop_header_branch
                %167 = sbr.rel (%p165) target = $region43
              $region40: #{disalign_fast_rcnn_forward.1} parent=35 // loop_body
                %v171 = vld [vmem:[%s169] sm:$0xff]
                %172 = vst [vmem:[%s170] sm:$0xff] %v171
                %v173 = vld [vmem:[%s169 + $0x10] sm:$0xff]
                %174 = vst [vmem:[%s170 + $0x8] sm:$0xff] %v173
              $region41: #{disalign_fast_rcnn_forward.1} parent=35 // loop_footer
                %s168 = sadd.s32 1, %s164
              $region42: #{disalign_fast_rcnn_forward.1} parent=35 // loop_footer_branch
                %163 = sbr.rel target = $region38
              $region43: #{disalign_fast_rcnn_forward.1} parent=35 // loop_exit
                _
            $region36: #{disalign_fast_rcnn_forward.1} parent=27 // pred_fallthru
              _
          $region28: #{disalign_fast_rcnn_forward.1} parent=23 // pred_fallthru
            _
          %191 = vnop
        $region24: #{disalign_fast_rcnn_forward.1} parent=19 // pred_fallthru
          _
        // Predicated region
        $region59: #{disalign_fast_rcnn_forward.1} parent=19 // pred_check
          %p192 = pneg %p69
        $region60: #{disalign_fast_rcnn_forward.1} parent=19 // pred_check_branch
          %194 = sbr.rel (%p192) target = $region62
        $region61: #{disalign_fast_rcnn_forward.1} parent=19 // pred_region
          %s195 = smul.u32 16, %s17
          %p196 = scmp.lt.s32.totalorder %s195, 31
          %s197 = scalar_select %p196, %s195, 31
          %s198 = smul.addr %s197, 8
          %s199 = scalar_lea.vmem %s1, %s198
          %s200 = smul.u32 16, %s17
        $region62: #{disalign_fast_rcnn_forward.1} parent=19 // pred_fallthru
          _
      $region20: #{disalign_fast_rcnn_forward.1} parent=5 // pred_fallthru
        _
      %p201 = scmp.le.s32.totalorder 1, %s9
      %p202 = scmp.lt.s32.totalorder %s9, 3
      %p203 = pnand %p201, %p202
      %p204 = pneg %p203
      // Predicated region
      $region63: #{disalign_fast_rcnn_forward.1} parent=5 // pred_check
        _
      $region64: #{disalign_fast_rcnn_forward.1} parent=5 // pred_check_branch
        %206 = sbr.rel (%p203) target = $region66
      $region65: #{disalign_fast_rcnn_forward.1} parent=5 // pred_region
        %s207 = ssub.s32 %s9, 1
        %s208 = sand.u32 %s36, 1
        %s209 = sand.u32 %s36, 1
        %s210 = smul.addr %s209, 16
        %s211 = scalar_lea.vmem [#allocation2], %s210
        // Predicated region
        $region67: #{disalign_fast_rcnn_forward.1} parent=65 // pred_check
          %p212 = pneg %p49
        $region68: #{disalign_fast_rcnn_forward.1} parent=65 // pred_check_branch
          %214 = sbr.rel (%p212) target = $region70
        $region69: #{disalign_fast_rcnn_forward.1} parent=65 // pred_region
          _
        $region70: #{disalign_fast_rcnn_forward.1} parent=65 // pred_fallthru
          _
        %s215 = sand.u32 %s36, 1
        %s216 = sand.u32 %s36, 1
        %s217 = smul.addr %s216, 16
        %s218 = scalar_lea.vmem [#allocation2], %s217
        %p219 = pneg %p49
        %p220 = pneg %p46
        %s221 = smul.u32 16, %s19
        %p222 = scmp.lt.s32.totalorder %s221, 31
        %s223 = scalar_select %p222, %s221, 31
        %s224 = smul.addr %s223, 8
        %s225 = scalar_lea.vmem %s1, %s224
        %p226 = pneg %p75
        %p227 = pneg %p72
        %p228 = pneg %p96
        %p229 = pneg %p93
        %p230 = pneg %p122
        %p231 = pneg %p119
        %s232 = smul.u32 2, %s18
        %p233 = scmp.lt.s32.totalorder %s232, 1
        %s234 = scalar_select %p233, %s232, 1
        %s235 = smul.addr %s234, 8
        %s236 = scalar_lea.vmem %s3, %s235
        %s237 = smul.u32 2, %s18
        %s238 = smul.u32 16, %s19
        %p239 = scmp.lt.s32.totalorder %s238, 31
        %s240 = scalar_select %p239, %s238, 31
        %s241 = smul.addr %s240, 8
        %s242 = scalar_lea.vmem %s1, %s241
        %s243 = smul.u32 16, %s19
        %s244 = smul.u32 2, %s18
        %p245 = scmp.lt.s32.totalorder %s244, 1
        %s246 = scalar_select %p245, %s244, 1
        %s247 = smul.addr %s246, 8
        %s248 = scalar_lea.vmem %s3, %s247
        %s249 = smul.u32 2, %s18
        %p250 = scmp.eq.s32.totalorder %s19, 0
        // Predicated region
        $region71: #{disalign_fast_rcnn_forward.1} parent=65 // pred_check
          %p251 = pneg %p250
        $region72: #{disalign_fast_rcnn_forward.1} parent=65 // pred_check_branch
          %253 = sbr.rel (%p251) target = $region74
        $region73: #{disalign_fast_rcnn_forward.1} parent=65 // pred_region
          %v254 = vld [vmem:[%s2] sm:$0x1]
          %v255 = vlaneseq
          %v256 = vshrl.u32 %v255, 7
          %v257 = vsub.s32 0, %v256
          %v258 = vrot.slane %v254, %v257
          %259 = vst [vmem:[%s248] sm:$0xff] %v258
          %260 = vst [vmem:[%s248 + $0x8] sm:$0xff] %v258
        $region74: #{disalign_fast_rcnn_forward.1} parent=65 // pred_fallthru
          _
        %v261 = vld [vmem:[%s248] sm:$0xff]
        %v262 = vld [vmem:[%s248 + $0x8] sm:$0xff]
        %v263 = vld [vmem:[%s211] sm:$0xff]
        %v264 = vld [vmem:[%s211 + $0x8] sm:$0xff]
        %v265 = vld [vmem:[%s242] sm:$0xff]
        %v266 = vld [vmem:[%s242 + $0x8] sm:$0xff]
        %v267 = vld [vmem:[%s242 + $0x10] sm:$0xff]
        %v268 = vld [vmem:[%s242 + $0x18] sm:$0xff]
        %v269 = vld [vmem:[%s242 + $0x20] sm:$0xff]
        %v270 = vld [vmem:[%s242 + $0x28] sm:$0xff]
        %v271 = vld [vmem:[%s242 + $0x30] sm:$0xff]
        %v272 = vld [vmem:[%s242 + $0x38] sm:$0xff]
        %v273 = vld [vmem:[%s242 + $0x40] sm:$0xff]
        %v274 = vld [vmem:[%s242 + $0x48] sm:$0xff]
        %v275 = vld [vmem:[%s242 + $0x50] sm:$0xff]
        %v276 = vld [vmem:[%s242 + $0x58] sm:$0xff]
        %v277 = vld [vmem:[%s242 + $0x60] sm:$0xff]
        %v278 = vld [vmem:[%s242 + $0x68] sm:$0xff]
        %v279 = vld [vmem:[%s242 + $0x70] sm:$0xff]
        %v280 = vld [vmem:[%s242 + $0x78] sm:$0xff]
        %281 = vmatprep.subr.mxu0 0.0
        %282 = vmatpush1.msra.mxu0 %v265
        %283 = vmatprep.subr.mxu0 0.0
        %284 = vmatpush1.msra.mxu0 %v266
        %285 = vmatprep.subr.mxu0 0.0
        %286 = vmatpush1.msra.mxu0 %v267
        %287 = vmatprep.subr.mxu0 0.0
        %288 = vmatpush1.msra.mxu0 %v268
        %289 = vmatprep.subr.mxu0 0.0
        %290 = vmatpush1.msra.mxu0 %v269
        %291 = vmatprep.subr.mxu0 0.0
        %292 = vmatpush1.msra.mxu0 %v270
        %293 = vmatprep.subr.mxu0 0.0
        %294 = vmatpush1.msra.mxu0 %v271
        %295 = vmatprep.subr.mxu0 0.0
        %296 = vmatpush1.msra.mxu0 %v272
        %297 = vmatprep.subr.mxu0 0.0
        %298 = vmatpush1.msra.mxu0 %v273
        %299 = vmatprep.subr.mxu0 0.0
        %300 = vmatpush1.msra.mxu0 %v274
        %301 = vmatprep.subr.mxu0 0.0
        %302 = vmatpush1.msra.mxu0 %v275
        %303 = vmatprep.subr.mxu0 0.0
        %304 = vmatpush1.msra.mxu0 %v276
        %305 = vmatprep.subr.mxu0 0.0
        %306 = vmatpush1.msra.mxu0 %v277
        %307 = vmatprep.subr.mxu0 0.0
        %308 = vmatpush1.msra.mxu0 %v278
        %309 = vmatprep.subr.mxu0 0.0
        %310 = vmatpush1.msra.mxu0 %v279
        %311 = vmatprep.subr.mxu0 0.0
        %312 = vmatpush1.msra.mxu0 %v280
        %313 = vmatprep.subr.mxu0 0.0
        %314 = vmatpush1.msra.mxu0 0.0
        %315 = vmatprep.subr.mxu0 0.0
        %316 = vmatpush1.msra.mxu0 0.0
        %317 = vmatprep.subr.mxu0 0.0
        %318 = vmatpush1.msra.mxu0 0.0
        %319 = vmatprep.subr.mxu0 0.0
        %320 = vmatpush1.msra.mxu0 0.0
        %321 = vmatprep.subr.mxu0 0.0
        %322 = vmatpush1.msra.mxu0 0.0
        %323 = vmatprep.subr.mxu0 0.0
        %324 = vmatpush1.msra.mxu0 0.0
        %325 = vmatprep.subr.mxu0 0.0
        %326 = vmatpush1.msra.mxu0 0.0
        %327 = vmatprep.subr.mxu0 0.0
        %328 = vmatpush1.msra.mxu0 0.0
        %329 = vmatprep.subr.mxu0 0.0
        %330 = vmatpush1.msra.mxu0 0.0
        %331 = vmatprep.subr.mxu0 0.0
        %332 = vmatpush1.msra.mxu0 0.0
        %333 = vmatprep.subr.mxu0 0.0
        %334 = vmatpush1.msra.mxu0 0.0
        %335 = vmatprep.subr.mxu0 0.0
        %336 = vmatpush1.msra.mxu0 0.0
        %337 = vmatprep.subr.mxu0 0.0
        %338 = vmatpush1.msra.mxu0 0.0
        %339 = vmatprep.subr.mxu0 0.0
        %340 = vmatpush1.msra.mxu0 0.0
        %341 = vmatprep.subr.mxu0 0.0
        %342 = vmatpush1.msra.mxu0 0.0
        %343 = vmatprep.subr.mxu0 0.0
        %344 = vmatpush1.msra.mxu0 0.0
        %345 = vmatprep.mubr.f32.mxu0 0.0
        %346 = vmatmul.mubr.f32.gmra.mrb[0].mxu0 %v263
        %v347 = vpop.f32.mrb[0].mxu0
        %v348 = vadd.f32 0.0, %v347
        %v349 = vpop.f32.mrb[0].mxu0
        %350 = vmatprep.mubr.f32.mxu0 0.0
        %351 = vmatmul.mubr.f32.gmra.mrb[0].mxu0 %v264
        %v352 = vpop.f32.mrb[0].mxu0
        %v353 = vadd.f32 0.0, %v352
        %v354 = vpop.f32.mrb[0].mxu0
        %355 = vdwg.mxu0
        %v356 = vadd.f32 %v261, %v348
        %v357 = vadd.f32 %v262, %v353
        %358 = vst [vmem:[%s248] sm:$0xff] %v356
        %359 = vst [vmem:[%s248 + $0x8] sm:$0xff] %v357
        %p360 = scmp.eq.s32.totalorder %s19, 1
        // Predicated region
        $region75: #{disalign_fast_rcnn_forward.1} parent=65 // pred_check
          %p361 = pneg %p360
        $region76: #{disalign_fast_rcnn_forward.1} parent=65 // pred_check_branch
          %363 = sbr.rel (%p361) target = $region78
        $region77: #{disalign_fast_rcnn_forward.1} parent=65 // pred_region
          %v364 = vld [vmem:[%s248] sm:$0xff]
          %v365 = vld [vmem:[%s248 + $0x8] sm:$0xff]
          %v366 = vxor.u32 %v364, 2147483648
          %v367 = vxor.u32 %v365, 2147483648
          %v368 = vmul.f32 %v366, 1.442695
          %v369 = vpow.pop %v368
          %v370 = vmul.f32 %v367, 1.442695
          %v371 = vpow.pop %v370
          %v372 = vadd.f32 %v369, 1.0
          %v373 = vadd.f32 %v371, 1.0
          %v374 = vrcp.pop %v372
          %v375 = vmul.f32 1.0, %v374
          %v376 = vrcp.pop %v373
          %v377 = vmul.f32 1.0, %v376
          %v378 = vld [vmem:[%s2 + $0x1] sm:$0x1]
          %v379 = vlaneseq
          %v380 = vshrl.u32 %v379, 7
          %v381 = vsub.s32 0, %v380
          %v382 = vrot.slane %v378, %v381
          %v383 = vmul.f32 %v364, %v382
          %v384 = vmul.f32 %v365, %v382
          %v385 = vld [vmem:[%s2 + $0x2] sm:$0x1]
          %v386 = vlaneseq
          %v387 = vshrl.u32 %v386, 7
          %v388 = vsub.s32 0, %v387
          %v389 = vrot.slane %v385, %v388
          %v390 = vadd.f32 %v383, %v389
          %v391 = vadd.f32 %v384, %v389
          %393 = vset.pattern.permute.xlu0 9
          %394 = vperm.xlu0 %393, %v375
          %v395 = vpop.permute.xlu0 %394
          %398 = vset.pattern.permute.xlu0 9
          %399 = vperm.xlu0 %398, %v377
          %v400 = vpop.permute.xlu0 %399
          %v402 = vmul.f32 %v395, %v390
          %v403 = vmul.f32 %v400, %v391
          %v404 = vadd.f32 %v364, %v402
          %v405 = vadd.f32 %v365, %v403
          %406 = vst [vmem:[%s248] sm:$0xff] %v404
          %407 = vst [vmem:[%s248 + $0x8] sm:$0xff] %v405
        $region78: #{disalign_fast_rcnn_forward.1} parent=65 // pred_fallthru
          _
        %s408 = smul.u32 2, %s18
        %p409 = scmp.lt.s32.totalorder %s408, 1
        %s410 = scalar_select %p409, %s408, 1
        %s411 = smul.addr %s410, 8
        %s412 = scalar_lea.vmem %s3, %s411
        // Predicated region
        $region79: #{disalign_fast_rcnn_forward.1} parent=65 // pred_check
          %p413 = pneg %p119
        $region80: #{disalign_fast_rcnn_forward.1} parent=65 // pred_check_branch
          %415 = sbr.rel (%p413) target = $region82
        $region81: #{disalign_fast_rcnn_forward.1} parent=65 // pred_region
          %s416 = smul.u32 2, %s18
        $region82: #{disalign_fast_rcnn_forward.1} parent=65 // pred_fallthru
          _
        // Predicated region
        $region83: #{disalign_fast_rcnn_forward.1} parent=65 // pred_check
          %p417 = pneg %p119
        $region84: #{disalign_fast_rcnn_forward.1} parent=65 // pred_check_branch
          %419 = sbr.rel (%p417) target = $region86
        $region85: #{disalign_fast_rcnn_forward.1} parent=65 // pred_region
          %s420 = smul.u32 2, %s18
          %p421 = scmp.lt.s32.totalorder %s420, 1
          %s422 = scalar_select %p421, %s420, 1
          %s423 = smul.addr %s422, 8
          %s424 = scalar_lea.vmem %s3, %s423
        $region86: #{disalign_fast_rcnn_forward.1} parent=65 // pred_fallthru
          _
      $region66: #{disalign_fast_rcnn_forward.1} parent=5 // pred_fallthru
        _
      %p425 = scmp.le.s32.totalorder 2, %s9
      // Predicated region
      $region87: #{disalign_fast_rcnn_forward.1} parent=5 // pred_check
        %p426 = pneg %p425
      $region88: #{disalign_fast_rcnn_forward.1} parent=5 // pred_check_branch
        %428 = sbr.rel (%p426) target = $region90
      $region89: #{disalign_fast_rcnn_forward.1} parent=5 // pred_region
        %s429 = ssub.s32 %s9, 2
      $region90: #{disalign_fast_rcnn_forward.1} parent=5 // pred_fallthru
        _
    $region6: #{disalign_fast_rcnn_forward.1} parent=1 // loop_footer
      %s13 = sadd.s32 1, %s9
    $region7: #{disalign_fast_rcnn_forward.1} parent=1 // loop_footer_branch
      %8 = sbr.rel target = $region3
    $region8: #{disalign_fast_rcnn_forward.1} parent=1 // loop_exit
      _

</llo_original>
